<compile_context>
chip_gen: v6e
topology: v6e:2x2x1
jax: 0.10.0
libtpu: 0.0.40
codegen_flags: <defaults>
</compile_context>

<pallas_src>
from functools import partial

import jax
import jax.numpy as jnp
from jax.experimental import pallas as pl
from jax.experimental.pallas import tpu as pltpu

LANE = 128      # vreg lane width
SUBLANE = 8     # f32 vreg sublane count


def _round_up(v, m):
    return (v + m - 1) // m * m


def actor_kernel(x_ref, w1_ref, b1_ref, w2_ref, b2_ref, out_ref):
    # fc1 + ReLU  (x: (TB, S), w1: (S, H_pad), b1: (1, H_pad))
    x = x_ref[...]
    h = jnp.dot(x, w1_ref[...], preferred_element_type=jnp.float32)
    h = jnp.maximum(h + b1_ref[...], 0.0)

    # fc2  (w2: (H_pad, A_pad), b2: (1, A_pad); padded lanes carry -1e30 bias)
    logits = jnp.dot(h, w2_ref[...], preferred_element_type=jnp.float32)
    logits = logits + b2_ref[...]

    # softmax over the feature (last) axis == torch dim=1; padded lanes -> exactly 0
    m = jnp.max(logits, axis=-1, keepdims=True)
    e = jnp.exp(logits - m)
    denom = jnp.sum(e, axis=-1, keepdims=True)
    # exact divide (memory-bound kernel; keeps sum(prob) == 1 to f32 precision)
    out_ref[...] = (e / denom).astype(out_ref.dtype)


def prepare_actor_params(w1, b1, w2, b2):
    """One-time padding of parameters to lane-dense (128-multiple) shapes.
    w1: (S, H); b1: (1, H); w2: (H, A); b2: (1, A)  (already (in, out))."""
    S, H = w1.shape
    A = w2.shape[1]
    H_pad = _round_up(H, LANE)
    A_pad = _round_up(A, LANE)

    w1_p = jnp.zeros((S, H_pad), jnp.float32).at[:, :H].set(w1)
    b1_p = jnp.zeros((1, H_pad), jnp.float32).at[:, :H].set(b1)
    w2_p = jnp.zeros((H_pad, A_pad), jnp.float32).at[:H, :A].set(w2)
    # padded action lanes get a huge negative bias -> exp underflows to exactly 0
    b2_p = jnp.full((1, A_pad), -1e30, jnp.float32).at[:, :A].set(b2)
    return w1_p, b1_p, w2_p, b2_p


@partial(jax.jit, static_argnames=("action_dim", "tb_max"))
def actor_forward(x, w1_p, b1_p, w2_p, b2_p, *, action_dim, tb_max=2048):
    """x: (B, state_dim); padded params from prepare_actor_params.
    Returns (B, action_dim) action probabilities."""
    B, S = x.shape
    H_pad = w1_p.shape[1]
    A_pad = w2_p.shape[1]

    # Batch tile: multiple of 8 sublanes, capped at tb_max; keep grid >= 2
    # steps whenever the batch allows so both v7x TensorCores get work.
    TB = min(tb_max, max(SUBLANE, _round_up(pl.cdiv(B, 2), SUBLANE)))
    grid = (pl.cdiv(B, TB),)

    flops = 2 * B * (S * H_pad + H_pad * A_pad)
    bytes_accessed = 4 * (B * S + S * H_pad + H_pad
                          + H_pad * A_pad + A_pad + B * A_pad)

    out = pl.pallas_call(
        actor_kernel,
        out_shape=jax.ShapeDtypeStruct((B, A_pad), jnp.float32),
        grid_spec=pltpu.PrefetchScalarGridSpec(
            num_scalar_prefetch=0,
            grid=grid,
            in_specs=[
                # batch-tiled activations (ragged last block is masked by Pallas)
                pl.BlockSpec((TB, S), lambda i: (i, 0)),
                # weights / biases stay resident across the batch grid
                pl.BlockSpec((S, H_pad), lambda i: (0, 0)),
                pl.BlockSpec((1, H_pad), lambda i: (0, 0)),
                pl.BlockSpec((H_pad, A_pad), lambda i: (0, 0)),
                pl.BlockSpec((1, A_pad), lambda i: (0, 0)),
            ],
            out_specs=pl.BlockSpec((TB, A_pad), lambda i: (i, 0)),
        ),
        compiler_params=pltpu.CompilerParams(
            dimension_semantics=("parallel",),   # batch axis: shard over TCs on v7x
        ),
        cost_estimate=pl.CostEstimate(
            flops=flops,
            transcendentals=B * A_pad,           # exp per output lane
            bytes_accessed=bytes_accessed,
        ),
    )(x, w1_p, b1_p, w2_p, b2_p)

    # Slice the real action columns back out; inside jit this fuses with the call.
    return out[:, :action_dim]


def init_actor_params(key, state_dim, hidden_dim, action_dim):
    """Deterministic init mimicking nn.Linear's uniform(-1/sqrt(fan_in), 1/sqrt(fan_in))."""
    k1, k2, k3, k4 = jax.random.split(key, 4)
    bound1 = 1.0 / jnp.sqrt(jnp.float32(state_dim))
    bound2 = 1.0 / jnp.sqrt(jnp.float32(hidden_dim))
    # weights stored as (in, out) == transpose of torch's (out, in)
    w1 = jax.random.uniform(k1, (state_dim, hidden_dim), jnp.float32, -bound1, bound1)
    b1 = jax.random.uniform(k2, (1, hidden_dim), jnp.float32, -bound1, bound1)
    w2 = jax.random.uniform(k3, (hidden_dim, action_dim), jnp.float32, -bound2, bound2)
    b2 = jax.random.uniform(k4, (1, action_dim), jnp.float32, -bound2, bound2)
    return w1, b1, w2, b2


if __name__ == "__main__":
    key = jax.random.PRNGKey(0)
    batch, state_dim, hidden_dim, action_dim = 2, 4, 32, 6

    k_x, k_p = jax.random.split(key)
    x = jax.random.normal(k_x, (batch, state_dim), jnp.float32)
    w1, b1, w2, b2 = init_actor_params(k_p, state_dim, hidden_dim, action_dim)

    # one-time lane-dense padding of parameters
    w1_p, b1_p, w2_p, b2_p = prepare_actor_params(w1, b1, w2, b2)

    a_prob = jax.block_until_ready(
        actor_forward(x, w1_p, b1_p, w2_p, b2_p, action_dim=action_dim))

    # reference check in plain JAX
    h_ref = jnp.maximum(x @ w1 + b1, 0.0)
    ref = jax.nn.softmax(h_ref @ w2 + b2, axis=1)
    assert a_prob.shape == (batch, action_dim)
    assert jnp.allclose(a_prob, ref, atol=1e-5, rtol=1e-5)
    assert jnp.allclose(jnp.sum(a_prob, axis=1), 1.0, atol=1e-5)

    print("KERNEL_OK")
</pallas_src>

<mosaic_0001>
module attributes {stable_mosaic.version = 11 : i64} {
  func.func @actor_kernel(%arg0: i32, %arg1: memref<8x4xf32, #tpu.memory_space<vmem>>, %arg2: memref<4x128xf32, #tpu.memory_space<vmem>>, %arg3: memref<1x128xf32, #tpu.memory_space<vmem>>, %arg4: memref<128x128xf32, #tpu.memory_space<vmem>>, %arg5: memref<1x128xf32, #tpu.memory_space<vmem>>, %arg6: memref<8x128xf32, #tpu.memory_space<vmem>>) attributes {dimension_semantics = [#tpu.dimension_semantics<parallel>], iteration_bounds = array<i64: 1>, scalar_prefetch = 0 : i64, scratch_operands = 0 : i64, tpu.core_type = #tpu.core_type<tc>, window_params = [{transform_indices = @transform_0, window_bounds = array<i64: 8, 4>}, {pipeline_mode = #tpu.pipeline_mode<synchronous>, transform_indices = @transform_1, window_bounds = array<i64: 4, 128>}, {pipeline_mode = #tpu.pipeline_mode<synchronous>, transform_indices = @transform_2, window_bounds = array<i64: 1, 128>}, {pipeline_mode = #tpu.pipeline_mode<synchronous>, transform_indices = @transform_3, window_bounds = array<i64: 128, 128>}, {pipeline_mode = #tpu.pipeline_mode<synchronous>, transform_indices = @transform_4, window_bounds = array<i64: 1, 128>}, {transform_indices = @transform_5, window_bounds = array<i64: 8, 128>}]} {
    %c0 = arith.constant 0 : index
    %c0_0 = arith.constant 0 : index
    %0 = vector.load %arg1[%c0, %c0_0] : memref<8x4xf32, #tpu.memory_space<vmem>>, vector<8x4xf32>
    %c0_1 = arith.constant 0 : index
    %c0_2 = arith.constant 0 : index
    %1 = vector.load %arg2[%c0_1, %c0_2] : memref<4x128xf32, #tpu.memory_space<vmem>>, vector<4x128xf32>
    %cst = arith.constant dense<0.000000e+00> : vector<8x128xf32>
    %2 = tpu.matmul %0, %1, %cst {dimension_numbers = #tpu.dot_dimension_numbers<[1], [0], [0], [1], [0, 0, 1, 1], [], []>} : vector<8x4xf32>, vector<4x128xf32>, vector<8x128xf32> -> vector<8x128xf32>
    %c0_3 = arith.constant 0 : index
    %c0_4 = arith.constant 0 : index
    %3 = vector.load %arg3[%c0_3, %c0_4] : memref<1x128xf32, #tpu.memory_space<vmem>>, vector<1x128xf32>
    %4 = vector.broadcast %3 : vector<1x128xf32> to vector<8x128xf32>
    %5 = arith.addf %2, %4 : vector<8x128xf32>
    %cst_5 = arith.constant 0.000000e+00 : f32
    %6 = vector.broadcast %cst_5 : f32 to vector<8x128xf32>
    %7 = arith.maximumf %5, %6 : vector<8x128xf32>
    %c0_6 = arith.constant 0 : index
    %c0_7 = arith.constant 0 : index
    %8 = vector.load %arg4[%c0_6, %c0_7] : memref<128x128xf32, #tpu.memory_space<vmem>>, vector<128x128xf32>
    %cst_8 = arith.constant dense<0.000000e+00> : vector<8x128xf32>
    %9 = tpu.matmul %7, %8, %cst_8 {dimension_numbers = #tpu.dot_dimension_numbers<[1], [0], [0], [1], [0, 0, 1, 1], [], []>} : vector<8x128xf32>, vector<128x128xf32>, vector<8x128xf32> -> vector<8x128xf32>
    %c0_9 = arith.constant 0 : index
    %c0_10 = arith.constant 0 : index
    %10 = vector.load %arg5[%c0_9, %c0_10] : memref<1x128xf32, #tpu.memory_space<vmem>>, vector<1x128xf32>
    %11 = vector.broadcast %10 : vector<1x128xf32> to vector<8x128xf32>
    %12 = arith.addf %9, %11 : vector<8x128xf32>
    %cst_11 = arith.constant dense<0xFF800000> : vector<8xf32>
    %13 = vector.multi_reduction <maximumf>, %12, %cst_11 [1] : vector<8x128xf32> to vector<8xf32>
    %14 = vector.shape_cast %13 : vector<8xf32> to vector<8x1xf32>
    %15 = vector.broadcast %14 : vector<8x1xf32> to vector<8x128xf32>
    %16 = arith.subf %12, %15 : vector<8x128xf32>
    %17 = math.exp %16 : vector<8x128xf32>
    %cst_12 = arith.constant dense<0.000000e+00> : vector<8xf32>
    %18 = vector.multi_reduction <add>, %17, %cst_12 [1] : vector<8x128xf32> to vector<8xf32>
    %19 = vector.shape_cast %18 : vector<8xf32> to vector<8x1xf32>
    %20 = vector.broadcast %19 : vector<8x1xf32> to vector<8x128xf32>
    %21 = arith.divf %17, %20 : vector<8x128xf32>
    %c0_13 = arith.constant 0 : index
    %c0_14 = arith.constant 0 : index
    %22 = vector.load %arg6[%c0_13, %c0_14] : memref<8x128xf32, #tpu.memory_space<vmem>>, vector<8x128xf32>
    tpu.vector_store %arg6[%c0_13, %c0_14], %21 {strides = array<i32>} : memref<8x128xf32, #tpu.memory_space<vmem>>, vector<8x128xf32>,
    return
  }
  func.func @transform_0(%arg0: i32) -> (i32, i32) {
    %c0_i32 = arith.constant 0 : i32
    %c0_i32_0 = arith.constant 0 : i32
    return %arg0, %c0_i32 : i32, i32
  }
  func.func @transform_1(%arg0: i32) -> (i32, i32) {
    %c0_i32 = arith.constant 0 : i32
    %c0_i32_0 = arith.constant 0 : i32
    %c0_i32_1 = arith.constant 0 : i32
    return %c0_i32, %c0_i32_0 : i32, i32
  }
  func.func @transform_2(%arg0: i32) -> (i32, i32) {
    %c0_i32 = arith.constant 0 : i32
    %c0_i32_0 = arith.constant 0 : i32
    %c0_i32_1 = arith.constant 0 : i32
    return %c0_i32, %c0_i32_0 : i32, i32
  }
  func.func @transform_3(%arg0: i32) -> (i32, i32) {
    %c0_i32 = arith.constant 0 : i32
    %c0_i32_0 = arith.constant 0 : i32
    %c0_i32_1 = arith.constant 0 : i32
    return %c0_i32, %c0_i32_0 : i32, i32
  }
  func.func @transform_4(%arg0: i32) -> (i32, i32) {
    %c0_i32 = arith.constant 0 : i32
    %c0_i32_0 = arith.constant 0 : i32
    %c0_i32_1 = arith.constant 0 : i32
    return %c0_i32, %c0_i32_0 : i32, i32
  }
  func.func @transform_5(%arg0: i32) -> (i32, i32) {
    %c0_i32 = arith.constant 0 : i32
    %c0_i32_0 = arith.constant 0 : i32
    return %arg0, %c0_i32 : i32, i32
  }
}

</mosaic_0001>

<llo_original>
// kernel: actor_forward.1
$region0: #{actor_forward.1}
  #allocation0 [shape = 'u32[]', space=smem, size = 0x4, offset = 0x4, fixed_abs, tag = 'smem constant byte address 0x4 - core index']
  #allocation1 [shape = 'u32[144,128]{1,0:T(1,128)}', space=vmem, size = 0x12000, scoped, tag = 'internal scratch']
  %s0 = inlined_call_operand.hbm [shape: f32[2,4], index: 0, kind: input, shape index: {}]
  %s1 = inlined_call_operand.hbm [shape: f32[4,128], index: 1, kind: input, shape index: {}]
  %s2 = inlined_call_operand.vmem [shape: f32[1,128], index: 2, kind: input, shape index: {}]
  %s3 = inlined_call_operand.hbm [shape: f32[128,128], index: 3, kind: input, shape index: {}]
  %s4 = inlined_call_operand.vmem [shape: f32[1,128], index: 4, kind: input, shape index: {}]
  %s5 = inlined_call_operand.hbm [shape: f32[2,128], index: 5, kind: output, shape index: {}]
  %s6 = sld [smem:[#allocation0]]
  $region42: #{actor_forward.1} parent=0
    _
  %s8 = ssub.s32 1, %s6
  %s9 = scalar_select 0, %s8, %s6
  $region1: #{actor_forward.1} parent=0
    #allocation2 [shape = 'u8[4096]{0}', space=vmem, size = 0x1000, scoped, tag = 'input window, operand 0, single buffered']
    #allocation3 [shape = 's32[1]{0}', space=sflag, size = 0x4, scoped, tag = 'scoped memory for actor_forward.1']
    #allocation4 [shape = 's32[1]{0}', space=sflag, size = 0x4, scoped, tag = 'scoped memory for actor_forward.1']
    #allocation5 [shape = 'u8[2048]{0}', space=vmem, size = 0x800, scoped, tag = 'input window, operand 1, single buffered']
    #allocation6 [shape = 's32[1]{0}', space=sflag, size = 0x4, scoped, tag = 'scoped memory for actor_forward.1']
    #allocation7 [shape = 'u8[65536]{0}', space=vmem, size = 0x10000, scoped, tag = 'input window, operand 3, single buffered']
    #allocation8 [shape = 'u8[4096]{0}', space=vmem, size = 0x1000, scoped, tag = 'output window, operand 0, single buffered']
    %10 = vsyncpa [#allocation3], 0
    %11 = vsyncpa [#allocation6], 0
    %12 = vsyncpa [#allocation4], 0
    // Predicated region
    $region2: #{actor_forward.1} parent=1 // pred_check
      _
    $region3: #{actor_forward.1} parent=1 // pred_check_branch
      %14 = sbr.rel (0) target = $region5
    $region4: #{actor_forward.1} parent=1 // pred_region
      %s16 = ssub.s32 128, 32
      %17 = vsyncadd [#allocation3], %s16
      %s18 = sshll.u32 [#allocation2], 4
      %s19 = int_to_ptr.vmem [resolvable:$true] %s18
      %24 = dma.hbm_to_vmem [thread:$0]  %s0, 32, %s19, [#allocation3], 32, 32, 2
    $region5: #{actor_forward.1} parent=1 // pred_fallthru
      _
    // Predicated region
    $region6: #{actor_forward.1} parent=1 // pred_check
      _
    $region7: #{actor_forward.1} parent=1 // pred_check_branch
      %26 = sbr.rel (0) target = $region9
    $region8: #{actor_forward.1} parent=1 // pred_region
      %s28 = ssub.s32 64, 64
      %29 = vsyncadd [#allocation6], %s28
      %s31 = sshll.u32 [#allocation5], 4
      %s32 = int_to_ptr.vmem [resolvable:$true] %s31
      %34 = dma.hbm_to_vmem [thread:$0]  %s1, 64, %s32, [#allocation6]
    $region9: #{actor_forward.1} parent=1 // pred_fallthru
      _
    // Predicated region
    $region10: #{actor_forward.1} parent=1 // pred_check
      _
    $region11: #{actor_forward.1} parent=1 // pred_check_branch
      %36 = sbr.rel (0) target = $region13
    $region12: #{actor_forward.1} parent=1 // pred_region
      _
    $region13: #{actor_forward.1} parent=1 // pred_fallthru
      _
    // Predicated region
    $region14: #{actor_forward.1} parent=1 // pred_check
      _
    $region15: #{actor_forward.1} parent=1 // pred_check_branch
      %38 = sbr.rel (0) target = $region17
    $region16: #{actor_forward.1} parent=1 // pred_region
      %s40 = ssub.s32 2048, 2048
      %41 = vsyncadd [#allocation6], %s40
      %s42 = sshll.u32 [#allocation7], 4
      %s43 = int_to_ptr.vmem [resolvable:$true] %s42
      %48 = dma.hbm_to_vmem [thread:$0]  %s3, 2048, %s43, [#allocation6], 128, 128, 8
    $region17: #{actor_forward.1} parent=1 // pred_fallthru
      _
    // Predicated region
    $region18: #{actor_forward.1} parent=1 // pred_check
      _
    $region19: #{actor_forward.1} parent=1 // pred_check_branch
      %50 = sbr.rel (0) target = $region21
    $region20: #{actor_forward.1} parent=1 // pred_region
      _
    $region21: #{actor_forward.1} parent=1 // pred_fallthru
      _
    // Predicated region
    $region22: #{actor_forward.1} parent=1 // pred_check
      _
    $region23: #{actor_forward.1} parent=1 // pred_check_branch
      %52 = sbr.rel (0) target = $region25
    $region24: #{actor_forward.1} parent=1 // pred_region
      %53 = dma.done [#allocation3], 128
    $region25: #{actor_forward.1} parent=1 // pred_fallthru
      _
    // Predicated region
    $region26: #{actor_forward.1} parent=1 // pred_check
      _
    $region27: #{actor_forward.1} parent=1 // pred_check_branch
      %55 = sbr.rel (0) target = $region29
    $region28: #{actor_forward.1} parent=1 // pred_region
      %56 = dma.done [#allocation6], 64
    $region29: #{actor_forward.1} parent=1 // pred_fallthru
      _
    // Predicated region
    $region30: #{actor_forward.1} parent=1 // pred_check
      _
    $region31: #{actor_forward.1} parent=1 // pred_check_branch
      %58 = sbr.rel (0) target = $region33
    $region32: #{actor_forward.1} parent=1 // pred_region
      %59 = dma.done [#allocation6], 2048
    $region33: #{actor_forward.1} parent=1 // pred_fallthru
      _
    %v60 = vld [vmem:[#allocation2] sm:$0xff]
    %v61 = vld [vmem:[#allocation5] sm:$0xf]
    %v62 = vld [vmem:[%s2] sm:$0x1]
    %v64 = vlaneseq
    %v65 = vshrl.u32 %v64, 7
    %v66 = vsub.s32 0, %v65
    %v67 = vrot.slane %v62, %v66
    %vm69 = vcmask 31744
    %v71 = vsel %vm69, %v60, 0
    %vm73 = vcmask 1043456
    %v75 = vsel %vm73, %v61, 0
    %77 = vmatprep.subr.mxu0 0.0
    %78 = vmatpush1.msra.mxu0 0.0
    %79 = vmatprep.subr.mxu0 0.0
    %80 = vmatpush1.msra.mxu0 0.0
    %81 = vmatprep.subr.mxu0 0.0
    %82 = vmatpush1.msra.mxu0 0.0
    %83 = vmatprep.subr.mxu0 0.0
    %84 = vmatpush1.msra.mxu0 0.0
    %85 = vmatprep.subr.mxu0 0.0
    %86 = vmatpush1.msra.mxu0 0.0
    %87 = vmatprep.subr.mxu0 0.0
    %88 = vmatpush1.msra.mxu0 0.0
    %89 = vmatprep.subr.mxu0 0.0
    %90 = vmatpush1.msra.mxu0 0.0
    %91 = vmatprep.subr.mxu0 0.0
    %92 = vmatpush1.msra.mxu0 0.0
    %93 = vmatprep.subr.mxu0 0.0
    %94 = vmatpush1.msra.mxu0 0.0
    %95 = vmatprep.subr.mxu0 0.0
    %96 = vmatpush1.msra.mxu0 0.0
    %97 = vmatprep.subr.mxu0 0.0
    %98 = vmatpush1.msra.mxu0 0.0
    %99 = vmatprep.subr.mxu0 0.0
    %100 = vmatpush1.msra.mxu0 0.0
    %101 = vmatprep.subr.mxu0 0.0
    %102 = vmatpush1.msra.mxu0 0.0
    %103 = vmatprep.subr.mxu0 0.0
    %104 = vmatpush1.msra.mxu0 0.0
    %105 = vmatprep.subr.mxu0 0.0
    %106 = vmatpush1.msra.mxu0 0.0
    %107 = vmatprep.subr.mxu0 0.0
    %108 = vmatpush1.msra.mxu0 %v75
    %109 = vmatprep.subr.mxu0 0.0
    %110 = vmatpush2.msra.mxu0 0.0
    %111 = vmatprep.subr.mxu0 0.0
    %112 = vmatpush2.msra.mxu0 0.0
    %113 = vmatprep.subr.mxu0 0.0
    %114 = vmatpush2.msra.mxu0 0.0
    %115 = vmatprep.subr.mxu0 0.0
    %116 = vmatpush2.msra.mxu0 0.0
    %117 = vmatprep.subr.mxu0 0.0
    %118 = vmatpush2.msra.mxu0 0.0
    %119 = vmatprep.subr.mxu0 0.0
    %120 = vmatpush2.msra.mxu0 0.0
    %121 = vmatprep.subr.mxu0 0.0
    %122 = vmatpush2.msra.mxu0 0.0
    %123 = vmatprep.subr.mxu0 0.0
    %124 = vmatpush2.msra.mxu0 0.0
    %125 = vmatprep.subr.mxu0 0.0
    %126 = vmatpush2.msra.mxu0 0.0
    %127 = vmatprep.subr.mxu0 0.0
    %128 = vmatpush2.msra.mxu0 0.0
    %129 = vmatprep.subr.mxu0 0.0
    %130 = vmatpush2.msra.mxu0 0.0
    %131 = vmatprep.subr.mxu0 0.0
    %132 = vmatpush2.msra.mxu0 0.0
    %133 = vmatprep.subr.mxu0 0.0
    %134 = vmatpush2.msra.mxu0 0.0
    %135 = vmatprep.subr.mxu0 0.0
    %136 = vmatpush2.msra.mxu0 0.0
    %137 = vmatprep.subr.mxu0 0.0
    %138 = vmatpush2.msra.mxu0 0.0
    %139 = vmatprep.subr.mxu0 0.0
    %140 = vmatpush2.msra.mxu0 0.0
    %141 = vmatprep.mubr.f32.mxu0 0.0
    %142 = vmatmul.mubr.f32.gmra.mxu0 %v71
    %v143 = vpop.f32.mrf.mxu0
    %v144 = vadd.f32 %v67, %v143
    %v145 = vpop.f32.mrf.mxu0
    %146 = vdwg.mxu0
    %v147 = vmax.f32 %v144, 0.0
    %v148 = vld [vmem:[#allocation7] sm:$0xff]
    %v149 = vld [vmem:[#allocation7 + $0x8] sm:$0xff]
    %v150 = vld [vmem:[#allocation7 + $0x10] sm:$0xff]
    %v151 = vld [vmem:[#allocation7 + $0x18] sm:$0xff]
    %v152 = vld [vmem:[#allocation7 + $0x20] sm:$0xff]
    %v153 = vld [vmem:[#allocation7 + $0x28] sm:$0xff]
    %v154 = vld [vmem:[#allocation7 + $0x30] sm:$0xff]
    %v155 = vld [vmem:[#allocation7 + $0x38] sm:$0xff]
    %v156 = vld [vmem:[#allocation7 + $0x40] sm:$0xff]
    %v157 = vld [vmem:[#allocation7 + $0x48] sm:$0xff]
    %v158 = vld [vmem:[#allocation7 + $0x50] sm:$0xff]
    %v159 = vld [vmem:[#allocation7 + $0x58] sm:$0xff]
    %v160 = vld [vmem:[#allocation7 + $0x60] sm:$0xff]
    %v161 = vld [vmem:[#allocation7 + $0x68] sm:$0xff]
    %v162 = vld [vmem:[#allocation7 + $0x70] sm:$0xff]
    %v163 = vld [vmem:[#allocation7 + $0x78] sm:$0xff]
    %v164 = vld [vmem:[%s4] sm:$0x1]
    %v166 = vlaneseq
    %v167 = vshrl.u32 %v166, 7
    %v168 = vsub.s32 0, %v167
    %v169 = vrot.slane %v164, %v168
    %171 = vmatprep.subr.mxu0 0.0
    %172 = vmatpush1.msra.mxu0 %v163
    %173 = vmatprep.subr.mxu0 0.0
    %174 = vmatpush1.msra.mxu0 %v162
    %175 = vmatprep.subr.mxu0 0.0
    %176 = vmatpush1.msra.mxu0 %v161
    %177 = vmatprep.subr.mxu0 0.0
    %178 = vmatpush1.msra.mxu0 %v160
    %179 = vmatprep.subr.mxu0 0.0
    %180 = vmatpush1.msra.mxu0 %v159
    %181 = vmatprep.subr.mxu0 0.0
    %182 = vmatpush1.msra.mxu0 %v158
    %183 = vmatprep.subr.mxu0 0.0
    %184 = vmatpush1.msra.mxu0 %v157
    %185 = vmatprep.subr.mxu0 0.0
    %186 = vmatpush1.msra.mxu0 %v156
    %187 = vmatprep.subr.mxu0 0.0
    %188 = vmatpush1.msra.mxu0 %v155
    %189 = vmatprep.subr.mxu0 0.0
    %190 = vmatpush1.msra.mxu0 %v154
    %191 = vmatprep.subr.mxu0 0.0
    %192 = vmatpush1.msra.mxu0 %v153
    %193 = vmatprep.subr.mxu0 0.0
    %194 = vmatpush1.msra.mxu0 %v152
    %195 = vmatprep.subr.mxu0 0.0
    %196 = vmatpush1.msra.mxu0 %v151
    %197 = vmatprep.subr.mxu0 0.0
    %198 = vmatpush1.msra.mxu0 %v150
    %199 = vmatprep.subr.mxu0 0.0
    %200 = vmatpush1.msra.mxu0 %v149
    %201 = vmatprep.subr.mxu0 0.0
    %202 = vmatpush1.msra.mxu0 %v148
    %203 = vmatprep.subr.mxu0 0.0
    %204 = vmatpush2.msra.mxu0 0.0
    %205 = vmatprep.subr.mxu0 0.0
    %206 = vmatpush2.msra.mxu0 0.0
    %207 = vmatprep.subr.mxu0 0.0
    %208 = vmatpush2.msra.mxu0 0.0
    %209 = vmatprep.subr.mxu0 0.0
    %210 = vmatpush2.msra.mxu0 0.0
    %211 = vmatprep.subr.mxu0 0.0
    %212 = vmatpush2.msra.mxu0 0.0
    %213 = vmatprep.subr.mxu0 0.0
    %214 = vmatpush2.msra.mxu0 0.0
    %215 = vmatprep.subr.mxu0 0.0
    %216 = vmatpush2.msra.mxu0 0.0
    %217 = vmatprep.subr.mxu0 0.0
    %218 = vmatpush2.msra.mxu0 0.0
    %219 = vmatprep.subr.mxu0 0.0
    %220 = vmatpush2.msra.mxu0 0.0
    %221 = vmatprep.subr.mxu0 0.0
    %222 = vmatpush2.msra.mxu0 0.0
    %223 = vmatprep.subr.mxu0 0.0
    %224 = vmatpush2.msra.mxu0 0.0
    %225 = vmatprep.subr.mxu0 0.0
    %226 = vmatpush2.msra.mxu0 0.0
    %227 = vmatprep.subr.mxu0 0.0
    %228 = vmatpush2.msra.mxu0 0.0
    %229 = vmatprep.subr.mxu0 0.0
    %230 = vmatpush2.msra.mxu0 0.0
    %231 = vmatprep.subr.mxu0 0.0
    %232 = vmatpush2.msra.mxu0 0.0
    %233 = vmatprep.subr.mxu0 0.0
    %234 = vmatpush2.msra.mxu0 0.0
    %235 = vmatprep.mubr.f32.mxu0 0.0
    %236 = vmatmul.mubr.f32.gmra.mxu0 %v147
    %v237 = vpop.f32.mrf.mxu0
    %v238 = vadd.f32 %v169, %v237
    %v239 = vpop.f32.mrf.mxu0
    %240 = vdwg.mxu0
    %241 = vmax.xlane.f32.xlu0 %v238
    %v242 = vpop.xlane.xlu0 %241
    %v243 = vsub.f32 %v238, %v242
    %v244 = vmul.f32 %v243, 1.442695
    %v245 = vpow.pop %v244
    %246 = vadd.xlane.f32.xlu0 %v245
    %v247 = vpop.xlane.xlu0 %246
    %v248 = vrcp.pop %v247
    %v249 = vmul.f32 %v245, %v248
    %250 = vst [vmem:[#allocation8] sm:$0xff] %v249
    // Predicated region
    $region34: #{actor_forward.1} parent=1 // pred_check
      _
    $region35: #{actor_forward.1} parent=1 // pred_check_branch
      %252 = sbr.rel (0) target = $region37
    $region36: #{actor_forward.1} parent=1 // pred_region
      %s254 = ssub.s32 128, 32
      %255 = vsyncadd [#allocation4], %s254
      %s256 = sshll.u32 [#allocation8], 4
      %s257 = int_to_ptr.vmem [resolvable:$true] %s256
      %262 = dma.vmem_to_hbm [thread:$0]  %s257, 32, %s5, [#allocation4], 32, 32, 2
    $region37: #{actor_forward.1} parent=1 // pred_fallthru
      _
    // Predicated region
    $region38: #{actor_forward.1} parent=1 // pred_check
      _
    $region39: #{actor_forward.1} parent=1 // pred_check_branch
      %264 = sbr.rel (0) target = $region41
    $region40: #{actor_forward.1} parent=1 // pred_region
      %265 = dma.done [#allocation4], 128
    $region41: #{actor_forward.1} parent=1 // pred_fallthru
      _
    %266 = vsyncpa [#allocation3], 1
    %267 = vsyncpa [#allocation6], 1
    %268 = vsyncpa [#allocation4], 1

</llo_original>
